<compile_context>
chip_gen: v6e
topology: v6e:2x2x1
jax: 0.10.0
libtpu: 0.0.40
codegen_flags: <defaults>
</compile_context>

<pallas_src>
import functools

import jax
import jax.numpy as jnp
from jax.experimental import pallas as pl
from jax.experimental.pallas import tpu as pltpu


def _round_up(a, m):
    return (a + m - 1) // m * m


def _cnn_kernel(x_ref, w_ref, b_ref, o_ref, *, compute_dtype):
    # x_ref: (tn, L, C)     input char embeddings for tn words
    # w_ref: (K, C, Op)     Conv1d weight, per-tap (C, Op), Op lane-padded
    # b_ref: (1, Op)        bias (f32)
    # o_ref: (tn, Op)       max-over-time of relu(conv)
    tn, L, C = x_ref.shape
    K = w_ref.shape[0]
    Op = o_ref.shape[-1]
    L_out = L - K + 1

    # One clean merge of the leading dims (L is the full word length).
    x2 = x_ref[...].astype(compute_dtype).reshape(tn * L, C)

    # conv as K shifted dots:  y[n, t, o] = sum_k sum_c x[n, t+k, c] * w[k, c, o]
    acc = jnp.zeros((tn, L_out, Op), dtype=jnp.float32)
    for k in range(K):  # K is tiny (3-5): static unroll
        zk = jnp.dot(x2, w_ref[k], preferred_element_type=jnp.float32)
        acc = acc + zk.reshape(tn, L, Op)[:, k:k + L_out, :]

    # bias + relu + max over time, all in f32; single store.
    y = jnp.maximum(acc + b_ref[...], 0.0)              # (tn, L_out, Op)
    o_ref[...] = jnp.max(y, axis=1).astype(o_ref.dtype)  # (tn, Op)


def cnn_forward(x, weight, bias, *, window_size=3, tn=128,
                compute_dtype=jnp.bfloat16):
    """x: (S, B, L, C); weight: (O, C, K) PyTorch Conv1d layout; bias: (O,)."""
    S, B, L, C = x.shape
    O, C_w, K = weight.shape
    assert K == window_size and C_w == C
    N = S * B
    L_out = L - K + 1
    assert L_out >= 1

    # Row-block size: >=128 for realistic N, clamped (and kept a multiple of 8)
    # for small inputs so we don't over-pad the toy test case.
    tn = max(8, min(tn, _round_up(N, 8)))
    tn = _round_up(tn, 8)
    Np = _round_up(N, tn)          # pad rows (zero rows -> relu(bias), discarded)
    Op = _round_up(O, 128)         # lane-dense output channels

    # --- glue (plain JAX): only cheap reshapes / zero-pads, no im2col in HBM ---
    x3 = x.reshape(N, L, C)
    if Np != N:
        x3 = jnp.pad(x3, ((0, Np - N), (0, 0), (0, 0)))

    w_kco = jnp.transpose(weight, (2, 1, 0))                       # (K, C, O)
    w_kco = jnp.pad(w_kco, ((0, 0), (0, 0), (0, Op - O)))
    w_kco = w_kco.astype(compute_dtype)                            # tiny, reused by all blocks
    b2d = jnp.pad(bias, (0, Op - O)).astype(jnp.float32).reshape(1, Op)

    kernel = functools.partial(_cnn_kernel, compute_dtype=compute_dtype)

    out = pl.pallas_call(
        kernel,
        out_shape=jax.ShapeDtypeStruct((Np, Op), x.dtype),
        grid_spec=pltpu.PrefetchScalarGridSpec(
            num_scalar_prefetch=0,
            grid=(Np // tn,),                               # single parallel axis
            in_specs=[
                pl.BlockSpec((tn, L, C), lambda i: (i, 0, 0)),
                pl.BlockSpec((K, C, Op), lambda i: (0, 0, 0)),
                pl.BlockSpec((1, Op), lambda i: (0, 0)),
            ],
            out_specs=pl.BlockSpec((tn, Op), lambda i: (i, 0)),
        ),
        compiler_params=pltpu.CompilerParams(
            dimension_semantics=("parallel",)),
    )(x3, w_kco, b2d)

    return out[:N, :O].reshape(S, B, O)


if __name__ == "__main__":
    # small shapes consistent with the module:
    # sent_len=8, batch=2, max_word_length=16, char_emb_size=8, word_emb_size=32, window=3
    S, B, L, C, O, K = 8, 2, 16, 8, 32, 3

    key = jax.random.PRNGKey(0)
    kx, kw, kb = jax.random.split(key, 3)
    x = jax.random.normal(kx, (S, B, L, C), dtype=jnp.float32)
    weight = jax.random.normal(kw, (O, C, K), dtype=jnp.float32) * 0.1   # Conv1d weight (O, C, K)
    bias = jax.random.normal(kb, (O,), dtype=jnp.float32) * 0.1          # Conv1d bias (O,)

    # pure-JAX reference mirroring the PyTorch forward (f32)
    x_ncl = jnp.transpose(x.reshape(S * B, L, C), (0, 2, 1))             # (N, C, L)
    y = jax.lax.conv_general_dilated(
        x_ncl, weight, window_strides=(1,), padding="VALID",
        dimension_numbers=("NCH", "OIH", "NCH"))                         # (N, O, L_out)
    y = jnp.maximum(y + bias[None, :, None], 0.0)
    ref = jnp.max(y, axis=-1).reshape(S, B, O)

    # exact-precision path (f32 MXU) -- tight tolerance
    out_f32 = cnn_forward(x, weight, bias, window_size=K,
                          compute_dtype=jnp.float32)
    out_f32 = jax.block_until_ready(out_f32)
    assert out_f32.shape == (S, B, O)
    assert jnp.allclose(out_f32, ref, atol=1e-5, rtol=1e-5)

    # performance path (bf16 MXU operands, f32 accumulate/epilogue) -- loose tolerance
    out_bf16 = cnn_forward(x, weight, bias, window_size=K,
                           compute_dtype=jnp.bfloat16)
    out_bf16 = jax.block_until_ready(out_bf16)
    assert out_bf16.shape == (S, B, O)
    assert jnp.allclose(out_bf16, ref, atol=5e-2, rtol=5e-2)

    print("KERNEL_OK")
</pallas_src>

<mosaic_0001>
module attributes {stable_mosaic.version = 11 : i64} {
  func.func @_cnn_kernel(%arg0: i32, %arg1: memref<16x16x8xf32, #tpu.memory_space<vmem>>, %arg2: memref<3x8x128xf32, #tpu.memory_space<vmem>>, %arg3: memref<1x128xf32, #tpu.memory_space<vmem>>, %arg4: memref<16x128xf32, #tpu.memory_space<vmem>>) attributes {dimension_semantics = [#tpu.dimension_semantics<parallel>], iteration_bounds = array<i64: 1>, scalar_prefetch = 0 : i64, scratch_operands = 0 : i64, tpu.core_type = #tpu.core_type<tc>, window_params = [{transform_indices = @transform_0, window_bounds = array<i64: 16, 16, 8>}, {pipeline_mode = #tpu.pipeline_mode<synchronous>, transform_indices = @transform_1, window_bounds = array<i64: 3, 8, 128>}, {pipeline_mode = #tpu.pipeline_mode<synchronous>, transform_indices = @transform_2, window_bounds = array<i64: 1, 128>}, {transform_indices = @transform_3, window_bounds = array<i64: 16, 128>}]} {
    %c0 = arith.constant 0 : index
    %c0_0 = arith.constant 0 : index
    %c0_1 = arith.constant 0 : index
    %0 = vector.load %arg1[%c0, %c0_0, %c0_1] : memref<16x16x8xf32, #tpu.memory_space<vmem>>, vector<16x16x8xf32>
    %1 = vector.shape_cast %0 : vector<16x16x8xf32> to vector<256x8xf32>
    %cst = arith.constant 0.000000e+00 : f32
    %2 = vector.broadcast %cst : f32 to vector<16x14x128xf32>
    %c0_2 = arith.constant 0 : index
    %c0_3 = arith.constant 0 : index
    %c0_4 = arith.constant 0 : index
    %3 = vector.load %arg2[%c0_2, %c0_3, %c0_4] : memref<3x8x128xf32, #tpu.memory_space<vmem>>, vector<1x8x128xf32>
    %4 = vector.shape_cast %3 : vector<1x8x128xf32> to vector<8x128xf32>
    %cst_5 = arith.constant dense<0.000000e+00> : vector<256x128xf32>
    %5 = tpu.matmul %1, %4, %cst_5 {dimension_numbers = #tpu.dot_dimension_numbers<[1], [0], [0], [1], [0, 0, 1, 1], [], []>} : vector<256x8xf32>, vector<8x128xf32>, vector<256x128xf32> -> vector<256x128xf32>
    %6 = vector.shape_cast %5 : vector<256x128xf32> to vector<16x16x128xf32>
    %7 = vector.extract_strided_slice %6 {offsets = [0, 0, 0], sizes = [16, 14, 128], strides = [1, 1, 1]} : vector<16x16x128xf32> to vector<16x14x128xf32>
    %8 = arith.addf %2, %7 : vector<16x14x128xf32>
    %c1 = arith.constant 1 : index
    %c0_6 = arith.constant 0 : index
    %c0_7 = arith.constant 0 : index
    %9 = vector.load %arg2[%c1, %c0_6, %c0_7] : memref<3x8x128xf32, #tpu.memory_space<vmem>>, vector<1x8x128xf32>
    %10 = vector.shape_cast %9 : vector<1x8x128xf32> to vector<8x128xf32>
    %cst_8 = arith.constant dense<0.000000e+00> : vector<256x128xf32>
    %11 = tpu.matmul %1, %10, %cst_8 {dimension_numbers = #tpu.dot_dimension_numbers<[1], [0], [0], [1], [0, 0, 1, 1], [], []>} : vector<256x8xf32>, vector<8x128xf32>, vector<256x128xf32> -> vector<256x128xf32>
    %12 = vector.shape_cast %11 : vector<256x128xf32> to vector<16x16x128xf32>
    %13 = vector.extract_strided_slice %12 {offsets = [0, 1, 0], sizes = [16, 14, 128], strides = [1, 1, 1]} : vector<16x16x128xf32> to vector<16x14x128xf32>
    %14 = arith.addf %8, %13 : vector<16x14x128xf32>
    %c2 = arith.constant 2 : index
    %c0_9 = arith.constant 0 : index
    %c0_10 = arith.constant 0 : index
    %15 = vector.load %arg2[%c2, %c0_9, %c0_10] : memref<3x8x128xf32, #tpu.memory_space<vmem>>, vector<1x8x128xf32>
    %16 = vector.shape_cast %15 : vector<1x8x128xf32> to vector<8x128xf32>
    %cst_11 = arith.constant dense<0.000000e+00> : vector<256x128xf32>
    %17 = tpu.matmul %1, %16, %cst_11 {dimension_numbers = #tpu.dot_dimension_numbers<[1], [0], [0], [1], [0, 0, 1, 1], [], []>} : vector<256x8xf32>, vector<8x128xf32>, vector<256x128xf32> -> vector<256x128xf32>
    %18 = vector.shape_cast %17 : vector<256x128xf32> to vector<16x16x128xf32>
    %19 = vector.extract_strided_slice %18 {offsets = [0, 2, 0], sizes = [16, 14, 128], strides = [1, 1, 1]} : vector<16x16x128xf32> to vector<16x14x128xf32>
    %20 = arith.addf %14, %19 : vector<16x14x128xf32>
    %c0_12 = arith.constant 0 : index
    %c0_13 = arith.constant 0 : index
    %21 = vector.load %arg3[%c0_12, %c0_13] : memref<1x128xf32, #tpu.memory_space<vmem>>, vector<1x128xf32>
    %22 = vector.shape_cast %21 : vector<1x128xf32> to vector<1x1x128xf32>
    %23 = vector.broadcast %22 : vector<1x1x128xf32> to vector<16x14x128xf32>
    %24 = arith.addf %20, %23 : vector<16x14x128xf32>
    %cst_14 = arith.constant 0.000000e+00 : f32
    %25 = vector.broadcast %cst_14 : f32 to vector<16x14x128xf32>
    %26 = arith.maximumf %24, %25 : vector<16x14x128xf32>
    %cst_15 = arith.constant dense<0xFF800000> : vector<16x128xf32>
    %27 = vector.multi_reduction <maximumf>, %26, %cst_15 [1] : vector<16x14x128xf32> to vector<16x128xf32>
    %c0_16 = arith.constant 0 : index
    %c0_17 = arith.constant 0 : index
    %28 = vector.load %arg4[%c0_16, %c0_17] : memref<16x128xf32, #tpu.memory_space<vmem>>, vector<16x128xf32>
    tpu.vector_store %arg4[%c0_16, %c0_17], %27 {strides = array<i32>} : memref<16x128xf32, #tpu.memory_space<vmem>>, vector<16x128xf32>,
    return
  }
  func.func @transform_0(%arg0: i32) -> (i32, i32, i32) {
    %c0_i32 = arith.constant 0 : i32
    %c0_i32_0 = arith.constant 0 : i32
    %c0_i32_1 = arith.constant 0 : i32
    return %arg0, %c0_i32, %c0_i32_0 : i32, i32, i32
  }
  func.func @transform_1(%arg0: i32) -> (i32, i32, i32) {
    %c0_i32 = arith.constant 0 : i32
    %c0_i32_0 = arith.constant 0 : i32
    %c0_i32_1 = arith.constant 0 : i32
    %c0_i32_2 = arith.constant 0 : i32
    return %c0_i32, %c0_i32_0, %c0_i32_1 : i32, i32, i32
  }
  func.func @transform_2(%arg0: i32) -> (i32, i32) {
    %c0_i32 = arith.constant 0 : i32
    %c0_i32_0 = arith.constant 0 : i32
    %c0_i32_1 = arith.constant 0 : i32
    return %c0_i32, %c0_i32_0 : i32, i32
  }
  func.func @transform_3(%arg0: i32) -> (i32, i32) {
    %c0_i32 = arith.constant 0 : i32
    %c0_i32_0 = arith.constant 0 : i32
    return %arg0, %c0_i32 : i32, i32
  }
}

</mosaic_0001>

<llo_original>
// kernel: tpu_custom_call.1
$region0: #{tpu_custom_call.1}
  #allocation0 [shape = 'u32[]', space=smem, size = 0x4, offset = 0x4, fixed_abs, tag = 'smem constant byte address 0x4 - core index']
  #allocation1 [shape = 'u32[144,128]{1,0:T(1,128)}', space=vmem, size = 0x12000, scoped, tag = 'internal scratch']
  %s0 = inlined_call_operand.vmem [shape: f32[16,16,8], index: 0, kind: input, shape index: {}]
  %s1 = inlined_call_operand.vmem [shape: f32[3,8,128], index: 1, kind: input, shape index: {}]
  %s2 = inlined_call_operand.vmem [shape: f32[1,128], index: 2, kind: input, shape index: {}]
  %s3 = inlined_call_operand.hbm [shape: f32[16,128], index: 3, kind: output, shape index: {}]
  %s4 = sld [smem:[#allocation0]]
  $region22: #{tpu_custom_call.1} parent=0
    _
  %s6 = ssub.s32 1, %s4
  %s7 = scalar_select 0, %s6, %s4
  $region1: #{tpu_custom_call.1} parent=0
    #allocation2 [shape = 'u8[8192]{0}', space=vmem, size = 0x2000, scoped, tag = 'output window, operand 0, single buffered']
    #allocation3 [shape = 's32[1]{0}', space=sflag, size = 0x4, scoped, tag = 'scoped memory for tpu_custom_call.1']
    %8 = vsyncpa [#allocation3], 0
    // Predicated region
    $region2: #{tpu_custom_call.1} parent=1 // pred_check
      _
    $region3: #{tpu_custom_call.1} parent=1 // pred_check_branch
      %10 = sbr.rel (0) target = $region5
    $region4: #{tpu_custom_call.1} parent=1 // pred_region
      _
    $region5: #{tpu_custom_call.1} parent=1 // pred_fallthru
      _
    // Predicated region
    $region6: #{tpu_custom_call.1} parent=1 // pred_check
      _
    $region7: #{tpu_custom_call.1} parent=1 // pred_check_branch
      %12 = sbr.rel (0) target = $region9
    $region8: #{tpu_custom_call.1} parent=1 // pred_region
      _
    $region9: #{tpu_custom_call.1} parent=1 // pred_fallthru
      _
    // Predicated region
    $region10: #{tpu_custom_call.1} parent=1 // pred_check
      _
    $region11: #{tpu_custom_call.1} parent=1 // pred_check_branch
      %14 = sbr.rel (0) target = $region13
    $region12: #{tpu_custom_call.1} parent=1 // pred_region
      _
    $region13: #{tpu_custom_call.1} parent=1 // pred_fallthru
      _
    %v15 = vld [vmem:[%s0] sm:$0xff]
    %v16 = vld [vmem:[%s0 + $0x8] sm:$0xff]
    %v17 = vld [vmem:[%s0 + $0x10] sm:$0xff]
    %v18 = vld [vmem:[%s0 + $0x18] sm:$0xff]
    %v19 = vld [vmem:[%s0 + $0x20] sm:$0xff]
    %v20 = vld [vmem:[%s0 + $0x28] sm:$0xff]
    %v21 = vld [vmem:[%s0 + $0x30] sm:$0xff]
    %v22 = vld [vmem:[%s0 + $0x38] sm:$0xff]
    %v23 = vld [vmem:[%s0 + $0x40] sm:$0xff]
    %v24 = vld [vmem:[%s0 + $0x48] sm:$0xff]
    %v25 = vld [vmem:[%s0 + $0x50] sm:$0xff]
    %v26 = vld [vmem:[%s0 + $0x58] sm:$0xff]
    %v27 = vld [vmem:[%s0 + $0x60] sm:$0xff]
    %v28 = vld [vmem:[%s0 + $0x68] sm:$0xff]
    %v29 = vld [vmem:[%s0 + $0x70] sm:$0xff]
    %v30 = vld [vmem:[%s0 + $0x78] sm:$0xff]
    %v31 = vld [vmem:[%s0 + $0x80] sm:$0xff]
    %v32 = vld [vmem:[%s0 + $0x88] sm:$0xff]
    %v33 = vld [vmem:[%s0 + $0x90] sm:$0xff]
    %v34 = vld [vmem:[%s0 + $0x98] sm:$0xff]
    %v35 = vld [vmem:[%s0 + $0xa0] sm:$0xff]
    %v36 = vld [vmem:[%s0 + $0xa8] sm:$0xff]
    %v37 = vld [vmem:[%s0 + $0xb0] sm:$0xff]
    %v38 = vld [vmem:[%s0 + $0xb8] sm:$0xff]
    %v39 = vld [vmem:[%s0 + $0xc0] sm:$0xff]
    %v40 = vld [vmem:[%s0 + $0xc8] sm:$0xff]
    %v41 = vld [vmem:[%s0 + $0xd0] sm:$0xff]
    %v42 = vld [vmem:[%s0 + $0xd8] sm:$0xff]
    %v43 = vld [vmem:[%s0 + $0xe0] sm:$0xff]
    %v44 = vld [vmem:[%s0 + $0xe8] sm:$0xff]
    %v45 = vld [vmem:[%s0 + $0xf0] sm:$0xff]
    %v46 = vld [vmem:[%s0 + $0xf8] sm:$0xff]
    %v47 = vld [vmem:[%s1] sm:$0xff]
    %vm48 = vcmask 64512
    %v50 = vsel %vm48, %v15, 0
    %v53 = vsel %vm48, %v16, 0
    %v56 = vsel %vm48, %v17, 0
    %v59 = vsel %vm48, %v18, 0
    %v62 = vsel %vm48, %v19, 0
    %v65 = vsel %vm48, %v20, 0
    %v68 = vsel %vm48, %v21, 0
    %v71 = vsel %vm48, %v22, 0
    %v74 = vsel %vm48, %v23, 0
    %v77 = vsel %vm48, %v24, 0
    %v80 = vsel %vm48, %v25, 0
    %v83 = vsel %vm48, %v26, 0
    %v86 = vsel %vm48, %v27, 0
    %v89 = vsel %vm48, %v28, 0
    %v92 = vsel %vm48, %v29, 0
    %v95 = vsel %vm48, %v30, 0
    %v98 = vsel %vm48, %v31, 0
    %v101 = vsel %vm48, %v32, 0
    %v104 = vsel %vm48, %v33, 0
    %v107 = vsel %vm48, %v34, 0
    %v110 = vsel %vm48, %v35, 0
    %v113 = vsel %vm48, %v36, 0
    %v116 = vsel %vm48, %v37, 0
    %v119 = vsel %vm48, %v38, 0
    %v122 = vsel %vm48, %v39, 0
    %v125 = vsel %vm48, %v40, 0
    %v128 = vsel %vm48, %v41, 0
    %v131 = vsel %vm48, %v42, 0
    %v134 = vsel %vm48, %v43, 0
    %v137 = vsel %vm48, %v44, 0
    %v140 = vsel %vm48, %v45, 0
    %v143 = vsel %vm48, %v46, 0
    %145 = vmatprep.subr.mxu0 0.0
    %146 = vmatpush1.msra.mxu0 0.0
    %147 = vmatprep.subr.mxu0 0.0
    %148 = vmatpush1.msra.mxu0 0.0
    %149 = vmatprep.subr.mxu0 0.0
    %150 = vmatpush1.msra.mxu0 0.0
    %151 = vmatprep.subr.mxu0 0.0
    %152 = vmatpush1.msra.mxu0 0.0
    %153 = vmatprep.subr.mxu0 0.0
    %154 = vmatpush1.msra.mxu0 0.0
    %155 = vmatprep.subr.mxu0 0.0
    %156 = vmatpush1.msra.mxu0 0.0
    %157 = vmatprep.subr.mxu0 0.0
    %158 = vmatpush1.msra.mxu0 0.0
    %159 = vmatprep.subr.mxu0 0.0
    %160 = vmatpush1.msra.mxu0 0.0
    %161 = vmatprep.subr.mxu0 0.0
    %162 = vmatpush1.msra.mxu0 0.0
    %163 = vmatprep.subr.mxu0 0.0
    %164 = vmatpush1.msra.mxu0 0.0
    %165 = vmatprep.subr.mxu0 0.0
    %166 = vmatpush1.msra.mxu0 0.0
    %167 = vmatprep.subr.mxu0 0.0
    %168 = vmatpush1.msra.mxu0 0.0
    %169 = vmatprep.subr.mxu0 0.0
    %170 = vmatpush1.msra.mxu0 0.0
    %171 = vmatprep.subr.mxu0 0.0
    %172 = vmatpush1.msra.mxu0 0.0
    %173 = vmatprep.subr.mxu0 0.0
    %174 = vmatpush1.msra.mxu0 0.0
    %175 = vmatprep.subr.mxu0 0.0
    %176 = vmatpush1.msra.mxu0 %v47
    %177 = vmatprep.subr.mxu0 0.0
    %178 = vmatpush2.msra.mxu0 0.0
    %179 = vmatprep.subr.mxu0 0.0
    %180 = vmatpush2.msra.mxu0 0.0
    %181 = vmatprep.subr.mxu0 0.0
    %182 = vmatpush2.msra.mxu0 0.0
    %183 = vmatprep.subr.mxu0 0.0
    %184 = vmatpush2.msra.mxu0 0.0
    %185 = vmatprep.subr.mxu0 0.0
    %186 = vmatpush2.msra.mxu0 0.0
    %187 = vmatprep.subr.mxu0 0.0
    %188 = vmatpush2.msra.mxu0 0.0
    %189 = vmatprep.subr.mxu0 0.0
    %190 = vmatpush2.msra.mxu0 0.0
    %191 = vmatprep.subr.mxu0 0.0
    %192 = vmatpush2.msra.mxu0 0.0
    %193 = vmatprep.subr.mxu0 0.0
    %194 = vmatpush2.msra.mxu0 0.0
    %195 = vmatprep.subr.mxu0 0.0
    %196 = vmatpush2.msra.mxu0 0.0
    %197 = vmatprep.subr.mxu0 0.0
    %198 = vmatpush2.msra.mxu0 0.0
    %199 = vmatprep.subr.mxu0 0.0
    %200 = vmatpush2.msra.mxu0 0.0
    %201 = vmatprep.subr.mxu0 0.0
    %202 = vmatpush2.msra.mxu0 0.0
    %203 = vmatprep.subr.mxu0 0.0
    %204 = vmatpush2.msra.mxu0 0.0
    %205 = vmatprep.subr.mxu0 0.0
    %206 = vmatpush2.msra.mxu0 0.0
    %207 = vmatprep.subr.mxu0 0.0
    %208 = vmatpush2.msra.mxu0 0.0
    %209 = vmatprep.mubr.f32.mxu0 0.0
    %210 = vmatmul.mubr.f32.gmra.mxu0 %v50
    %v211 = vpop.f32.mrf.mxu0
    %v212 = vadd.f32 0.0, %v211
    %v213 = vpop.f32.mrf.mxu0
    %214 = vmatprep.mubr.f32.mxu0 0.0
    %215 = vmatmul.mubr.f32.gmra.mxu0 %v53
    %v216 = vpop.f32.mrf.mxu0
    %v217 = vadd.f32 0.0, %v216
    %v218 = vpop.f32.mrf.mxu0
    %219 = vmatprep.mubr.f32.mxu0 0.0
    %220 = vmatmul.mubr.f32.gmra.mxu0 %v56
    %v221 = vpop.f32.mrf.mxu0
    %v222 = vadd.f32 0.0, %v221
    %v223 = vpop.f32.mrf.mxu0
    %224 = vmatprep.mubr.f32.mxu0 0.0
    %225 = vmatmul.mubr.f32.gmra.mxu0 %v59
    %v226 = vpop.f32.mrf.mxu0
    %v227 = vadd.f32 0.0, %v226
    %v228 = vpop.f32.mrf.mxu0
    %229 = vmatprep.mubr.f32.mxu0 0.0
    %230 = vmatmul.mubr.f32.gmra.mxu0 %v62
    %v231 = vpop.f32.mrf.mxu0
    %v232 = vadd.f32 0.0, %v231
    %v233 = vpop.f32.mrf.mxu0
    %234 = vmatprep.mubr.f32.mxu0 0.0
    %235 = vmatmul.mubr.f32.gmra.mxu0 %v65
    %v236 = vpop.f32.mrf.mxu0
    %v237 = vadd.f32 0.0, %v236
    %v238 = vpop.f32.mrf.mxu0
    %239 = vmatprep.mubr.f32.mxu0 0.0
    %240 = vmatmul.mubr.f32.gmra.mxu0 %v68
    %v241 = vpop.f32.mrf.mxu0
    %v242 = vadd.f32 0.0, %v241
    %v243 = vpop.f32.mrf.mxu0
    %244 = vmatprep.mubr.f32.mxu0 0.0
    %245 = vmatmul.mubr.f32.gmra.mxu0 %v71
    %v246 = vpop.f32.mrf.mxu0
    %v247 = vadd.f32 0.0, %v246
    %v248 = vpop.f32.mrf.mxu0
    %249 = vmatprep.mubr.f32.mxu0 0.0
    %250 = vmatmul.mubr.f32.gmra.mxu0 %v74
    %v251 = vpop.f32.mrf.mxu0
    %v252 = vadd.f32 0.0, %v251
    %v253 = vpop.f32.mrf.mxu0
    %254 = vmatprep.mubr.f32.mxu0 0.0
    %255 = vmatmul.mubr.f32.gmra.mxu0 %v77
    %v256 = vpop.f32.mrf.mxu0
    %v257 = vadd.f32 0.0, %v256
    %v258 = vpop.f32.mrf.mxu0
    %259 = vmatprep.mubr.f32.mxu0 0.0
    %260 = vmatmul.mubr.f32.gmra.mxu0 %v80
    %v261 = vpop.f32.mrf.mxu0
    %v262 = vadd.f32 0.0, %v261
    %v263 = vpop.f32.mrf.mxu0
    %264 = vmatprep.mubr.f32.mxu0 0.0
    %265 = vmatmul.mubr.f32.gmra.mxu0 %v83
    %v266 = vpop.f32.mrf.mxu0
    %v267 = vadd.f32 0.0, %v266
    %v268 = vpop.f32.mrf.mxu0
    %269 = vmatprep.mubr.f32.mxu0 0.0
    %270 = vmatmul.mubr.f32.gmra.mxu0 %v86
    %v271 = vpop.f32.mrf.mxu0
    %v272 = vadd.f32 0.0, %v271
    %v273 = vpop.f32.mrf.mxu0
    %274 = vmatprep.mubr.f32.mxu0 0.0
    %275 = vmatmul.mubr.f32.gmra.mxu0 %v89
    %v276 = vpop.f32.mrf.mxu0
    %v277 = vadd.f32 0.0, %v276
    %v278 = vpop.f32.mrf.mxu0
    %279 = vmatprep.mubr.f32.mxu0 0.0
    %280 = vmatmul.mubr.f32.gmra.mxu0 %v92
    %v281 = vpop.f32.mrf.mxu0
    %v282 = vadd.f32 0.0, %v281
    %v283 = vpop.f32.mrf.mxu0
    %284 = vmatprep.mubr.f32.mxu0 0.0
    %285 = vmatmul.mubr.f32.gmra.mxu0 %v95
    %v286 = vpop.f32.mrf.mxu0
    %v287 = vadd.f32 0.0, %v286
    %v288 = vpop.f32.mrf.mxu0
    %289 = vmatprep.mubr.f32.mxu0 0.0
    %290 = vmatmul.mubr.f32.gmra.mxu0 %v98
    %v291 = vpop.f32.mrf.mxu0
    %v292 = vadd.f32 0.0, %v291
    %v293 = vpop.f32.mrf.mxu0
    %294 = vmatprep.mubr.f32.mxu0 0.0
    %295 = vmatmul.mubr.f32.gmra.mxu0 %v101
    %v296 = vpop.f32.mrf.mxu0
    %v297 = vadd.f32 0.0, %v296
    %v298 = vpop.f32.mrf.mxu0
    %299 = vmatprep.mubr.f32.mxu0 0.0
    %300 = vmatmul.mubr.f32.gmra.mxu0 %v104
    %v301 = vpop.f32.mrf.mxu0
    %v302 = vadd.f32 0.0, %v301
    %v303 = vpop.f32.mrf.mxu0
    %304 = vmatprep.mubr.f32.mxu0 0.0
    %305 = vmatmul.mubr.f32.gmra.mxu0 %v107
    %v306 = vpop.f32.mrf.mxu0
    %v307 = vadd.f32 0.0, %v306
    %v308 = vpop.f32.mrf.mxu0
    %309 = vmatprep.mubr.f32.mxu0 0.0
    %310 = vmatmul.mubr.f32.gmra.mxu0 %v110
    %v311 = vpop.f32.mrf.mxu0
    %v312 = vadd.f32 0.0, %v311
    %v313 = vpop.f32.mrf.mxu0
    %314 = vmatprep.mubr.f32.mxu0 0.0
    %315 = vmatmul.mubr.f32.gmra.mxu0 %v113
    %v316 = vpop.f32.mrf.mxu0
    %v317 = vadd.f32 0.0, %v316
    %v318 = vpop.f32.mrf.mxu0
    %319 = vmatprep.mubr.f32.mxu0 0.0
    %320 = vmatmul.mubr.f32.gmra.mxu0 %v116
    %v321 = vpop.f32.mrf.mxu0
    %v322 = vadd.f32 0.0, %v321
    %v323 = vpop.f32.mrf.mxu0
    %324 = vmatprep.mubr.f32.mxu0 0.0
    %325 = vmatmul.mubr.f32.gmra.mxu0 %v119
    %v326 = vpop.f32.mrf.mxu0
    %v327 = vadd.f32 0.0, %v326
    %v328 = vpop.f32.mrf.mxu0
    %329 = vmatprep.mubr.f32.mxu0 0.0
    %330 = vmatmul.mubr.f32.gmra.mxu0 %v122
    %v331 = vpop.f32.mrf.mxu0
    %v332 = vadd.f32 0.0, %v331
    %v333 = vpop.f32.mrf.mxu0
    %334 = vmatprep.mubr.f32.mxu0 0.0
    %335 = vmatmul.mubr.f32.gmra.mxu0 %v125
    %v336 = vpop.f32.mrf.mxu0
    %v337 = vadd.f32 0.0, %v336
    %v338 = vpop.f32.mrf.mxu0
    %339 = vmatprep.mubr.f32.mxu0 0.0
    %340 = vmatmul.mubr.f32.gmra.mxu0 %v128
    %v341 = vpop.f32.mrf.mxu0
    %v342 = vadd.f32 0.0, %v341
    %v343 = vpop.f32.mrf.mxu0
    %344 = vmatprep.mubr.f32.mxu0 0.0
    %345 = vmatmul.mubr.f32.gmra.mxu0 %v131
    %v346 = vpop.f32.mrf.mxu0
    %v347 = vadd.f32 0.0, %v346
    %v348 = vpop.f32.mrf.mxu0
    %349 = vmatprep.mubr.f32.mxu0 0.0
    %350 = vmatmul.mubr.f32.gmra.mxu0 %v134
    %v351 = vpop.f32.mrf.mxu0
    %v352 = vadd.f32 0.0, %v351
    %v353 = vpop.f32.mrf.mxu0
    %354 = vmatprep.mubr.f32.mxu0 0.0
    %355 = vmatmul.mubr.f32.gmra.mxu0 %v137
    %v356 = vpop.f32.mrf.mxu0
    %v357 = vadd.f32 0.0, %v356
    %v358 = vpop.f32.mrf.mxu0
    %359 = vmatprep.mubr.f32.mxu0 0.0
    %360 = vmatmul.mubr.f32.gmra.mxu0 %v140
    %v361 = vpop.f32.mrf.mxu0
    %v362 = vadd.f32 0.0, %v361
    %v363 = vpop.f32.mrf.mxu0
    %364 = vmatprep.mubr.f32.mxu0 0.0
    %365 = vmatmul.mubr.f32.gmra.mxu0 %v143
    %v366 = vpop.f32.mrf.mxu0
    %v367 = vadd.f32 0.0, %v366
    %v368 = vpop.f32.mrf.mxu0
    %369 = vdwg.mxu0
    %v370 = vadd.f32 %v212, 0.0
    %v371 = vadd.f32 %v217, 0.0
    %v372 = vadd.f32 %v222, 0.0
    %v373 = vadd.f32 %v227, 0.0
    %v374 = vadd.f32 %v232, 0.0
    %v375 = vadd.f32 %v237, 0.0
    %v376 = vadd.f32 %v242, 0.0
    %v377 = vadd.f32 %v247, 0.0
    %v378 = vadd.f32 %v252, 0.0
    %v379 = vadd.f32 %v257, 0.0
    %v380 = vadd.f32 %v262, 0.0
    %v381 = vadd.f32 %v267, 0.0
    %v382 = vadd.f32 %v272, 0.0
    %v383 = vadd.f32 %v277, 0.0
    %v384 = vadd.f32 %v282, 0.0
    %v385 = vadd.f32 %v287, 0.0
    %v386 = vadd.f32 %v292, 0.0
    %v387 = vadd.f32 %v297, 0.0
    %v388 = vadd.f32 %v302, 0.0
    %v389 = vadd.f32 %v307, 0.0
    %v390 = vadd.f32 %v312, 0.0
    %v391 = vadd.f32 %v317, 0.0
    %v392 = vadd.f32 %v322, 0.0
    %v393 = vadd.f32 %v327, 0.0
    %v394 = vadd.f32 %v332, 0.0
    %v395 = vadd.f32 %v337, 0.0
    %v396 = vadd.f32 %v342, 0.0
    %v397 = vadd.f32 %v347, 0.0
    %v398 = vadd.f32 %v352, 0.0
    %v399 = vadd.f32 %v357, 0.0
    %v400 = vadd.f32 %v362, 0.0
    %v401 = vadd.f32 %v367, 0.0
    %s402 = scalar_lea.vmem %s1, 8
    %v403 = vld [vmem:[%s402] sm:$0xff]
    %404 = vmatprep.subr.mxu0 0.0
    %405 = vmatpush1.msra.mxu0 0.0
    %406 = vmatprep.subr.mxu0 0.0
    %407 = vmatpush1.msra.mxu0 0.0
    %408 = vmatprep.subr.mxu0 0.0
    %409 = vmatpush1.msra.mxu0 0.0
    %410 = vmatprep.subr.mxu0 0.0
    %411 = vmatpush1.msra.mxu0 0.0
    %412 = vmatprep.subr.mxu0 0.0
    %413 = vmatpush1.msra.mxu0 0.0
    %414 = vmatprep.subr.mxu0 0.0
    %415 = vmatpush1.msra.mxu0 0.0
    %416 = vmatprep.subr.mxu0 0.0
    %417 = vmatpush1.msra.mxu0 0.0
    %418 = vmatprep.subr.mxu0 0.0
    %419 = vmatpush1.msra.mxu0 0.0
    %420 = vmatprep.subr.mxu0 0.0
    %421 = vmatpush1.msra.mxu0 0.0
    %422 = vmatprep.subr.mxu0 0.0
    %423 = vmatpush1.msra.mxu0 0.0
    %424 = vmatprep.subr.mxu0 0.0
    %425 = vmatpush1.msra.mxu0 0.0
    %426 = vmatprep.subr.mxu0 0.0
    %427 = vmatpush1.msra.mxu0 0.0
    %428 = vmatprep.subr.mxu0 0.0
    %429 = vmatpush1.msra.mxu0 0.0
    %430 = vmatprep.subr.mxu0 0.0
    %431 = vmatpush1.msra.mxu0 0.0
    %432 = vmatprep.subr.mxu0 0.0
    %433 = vmatpush1.msra.mxu0 0.0
    %434 = vmatprep.subr.mxu0 0.0
    %435 = vmatpush1.msra.mxu0 %v403
    %436 = vmatprep.subr.mxu0 0.0
    %437 = vmatpush2.msra.mxu0 0.0
    %438 = vmatprep.subr.mxu0 0.0
    %439 = vmatpush2.msra.mxu0 0.0
    %440 = vmatprep.subr.mxu0 0.0
    %441 = vmatpush2.msra.mxu0 0.0
    %442 = vmatprep.subr.mxu0 0.0
    %443 = vmatpush2.msra.mxu0 0.0
    %444 = vmatprep.subr.mxu0 0.0
    %445 = vmatpush2.msra.mxu0 0.0
    %446 = vmatprep.subr.mxu0 0.0
    %447 = vmatpush2.msra.mxu0 0.0
    %448 = vmatprep.subr.mxu0 0.0
    %449 = vmatpush2.msra.mxu0 0.0
    %450 = vmatprep.subr.mxu0 0.0
    %451 = vmatpush2.msra.mxu0 0.0
    %452 = vmatprep.subr.mxu0 0.0
    %453 = vmatpush2.msra.mxu0 0.0
    %454 = vmatprep.subr.mxu0 0.0
    %455 = vmatpush2.msra.mxu0 0.0
    %456 = vmatprep.subr.mxu0 0.0
    %457 = vmatpush2.msra.mxu0 0.0
    %458 = vmatprep.subr.mxu0 0.0
    %459 = vmatpush2.msra.mxu0 0.0
    %460 = vmatprep.subr.mxu0 0.0
    %461 = vmatpush2.msra.mxu0 0.0
    %462 = vmatprep.subr.mxu0 0.0
    %463 = vmatpush2.msra.mxu0 0.0
    %464 = vmatprep.subr.mxu0 0.0
    %465 = vmatpush2.msra.mxu0 0.0
    %466 = vmatprep.subr.mxu0 0.0
    %467 = vmatpush2.msra.mxu0 0.0
    %468 = vmatprep.mubr.f32.mxu0 0.0
    %469 = vmatmul.mubr.f32.gmra.mxu0 %v50
    %v470 = vpop.f32.mrf.mxu0
    %v471 = vadd.f32 0.0, %v470
    %v472 = vpop.f32.mrf.mxu0
    %473 = vmatprep.mubr.f32.mxu0 0.0
    %474 = vmatmul.mubr.f32.gmra.mxu0 %v53
    %v475 = vpop.f32.mrf.mxu0
    %v476 = vadd.f32 0.0, %v475
    %v477 = vpop.f32.mrf.mxu0
    %478 = vmatprep.mubr.f32.mxu0 0.0
    %479 = vmatmul.mubr.f32.gmra.mxu0 %v56
    %v480 = vpop.f32.mrf.mxu0
    %v481 = vadd.f32 0.0, %v480
    %v482 = vpop.f32.mrf.mxu0
    %483 = vmatprep.mubr.f32.mxu0 0.0
    %484 = vmatmul.mubr.f32.gmra.mxu0 %v59
    %v485 = vpop.f32.mrf.mxu0
    %v486 = vadd.f32 0.0, %v485
    %v487 = vpop.f32.mrf.mxu0
    %488 = vmatprep.mubr.f32.mxu0 0.0
    %489 = vmatmul.mubr.f32.gmra.mxu0 %v62
    %v490 = vpop.f32.mrf.mxu0
    %v491 = vadd.f32 0.0, %v490
    %v492 = vpop.f32.mrf.mxu0
    %493 = vmatprep.mubr.f32.mxu0 0.0
    %494 = vmatmul.mubr.f32.gmra.mxu0 %v65
    %v495 = vpop.f32.mrf.mxu0
    %v496 = vadd.f32 0.0, %v495
    %v497 = vpop.f32.mrf.mxu0
    %498 = vmatprep.mubr.f32.mxu0 0.0
    %499 = vmatmul.mubr.f32.gmra.mxu0 %v68
    %v500 = vpop.f32.mrf.mxu0
    %v501 = vadd.f32 0.0, %v500
    %v502 = vpop.f32.mrf.mxu0
    %503 = vmatprep.mubr.f32.mxu0 0.0
    %504 = vmatmul.mubr.f32.gmra.mxu0 %v71
    %v505 = vpop.f32.mrf.mxu0
    %v506 = vadd.f32 0.0, %v505
    %v507 = vpop.f32.mrf.mxu0
    %508 = vmatprep.mubr.f32.mxu0 0.0
    %509 = vmatmul.mubr.f32.gmra.mxu0 %v74
    %v510 = vpop.f32.mrf.mxu0
    %v511 = vadd.f32 0.0, %v510
    %v512 = vpop.f32.mrf.mxu0
    %513 = vmatprep.mubr.f32.mxu0 0.0
    %514 = vmatmul.mubr.f32.gmra.mxu0 %v77
    %v515 = vpop.f32.mrf.mxu0
    %v516 = vadd.f32 0.0, %v515
    %v517 = vpop.f32.mrf.mxu0
    %518 = vmatprep.mubr.f32.mxu0 0.0
    %519 = vmatmul.mubr.f32.gmra.mxu0 %v80
    %v520 = vpop.f32.mrf.mxu0
    %v521 = vadd.f32 0.0, %v520
    %v522 = vpop.f32.mrf.mxu0
    %523 = vmatprep.mubr.f32.mxu0 0.0
    %524 = vmatmul.mubr.f32.gmra.mxu0 %v83
    %v525 = vpop.f32.mrf.mxu0
    %v526 = vadd.f32 0.0, %v525
    %v527 = vpop.f32.mrf.mxu0
    %528 = vmatprep.mubr.f32.mxu0 0.0
    %529 = vmatmul.mubr.f32.gmra.mxu0 %v86
    %v530 = vpop.f32.mrf.mxu0
    %v531 = vadd.f32 0.0, %v530
    %v532 = vpop.f32.mrf.mxu0
    %533 = vmatprep.mubr.f32.mxu0 0.0
    %534 = vmatmul.mubr.f32.gmra.mxu0 %v89
    %v535 = vpop.f32.mrf.mxu0
    %v536 = vadd.f32 0.0, %v535
    %v537 = vpop.f32.mrf.mxu0
    %538 = vmatprep.mubr.f32.mxu0 0.0
    %539 = vmatmul.mubr.f32.gmra.mxu0 %v92
    %v540 = vpop.f32.mrf.mxu0
    %v541 = vadd.f32 0.0, %v540
    %v542 = vpop.f32.mrf.mxu0
    %543 = vmatprep.mubr.f32.mxu0 0.0
    %544 = vmatmul.mubr.f32.gmra.mxu0 %v95
    %v545 = vpop.f32.mrf.mxu0
    %v546 = vadd.f32 0.0, %v545
    %v547 = vpop.f32.mrf.mxu0
    %548 = vmatprep.mubr.f32.mxu0 0.0
    %549 = vmatmul.mubr.f32.gmra.mxu0 %v98
    %v550 = vpop.f32.mrf.mxu0
    %v551 = vadd.f32 0.0, %v550
    %v552 = vpop.f32.mrf.mxu0
    %553 = vmatprep.mubr.f32.mxu0 0.0
    %554 = vmatmul.mubr.f32.gmra.mxu0 %v101
    %v555 = vpop.f32.mrf.mxu0
    %v556 = vadd.f32 0.0, %v555
    %v557 = vpop.f32.mrf.mxu0
    %558 = vmatprep.mubr.f32.mxu0 0.0
    %559 = vmatmul.mubr.f32.gmra.mxu0 %v104
    %v560 = vpop.f32.mrf.mxu0
    %v561 = vadd.f32 0.0, %v560
    %v562 = vpop.f32.mrf.mxu0
    %563 = vmatprep.mubr.f32.mxu0 0.0
    %564 = vmatmul.mubr.f32.gmra.mxu0 %v107
    %v565 = vpop.f32.mrf.mxu0
    %v566 = vadd.f32 0.0, %v565
    %v567 = vpop.f32.mrf.mxu0
    %568 = vmatprep.mubr.f32.mxu0 0.0
    %569 = vmatmul.mubr.f32.gmra.mxu0 %v110
    %v570 = vpop.f32.mrf.mxu0
    %v571 = vadd.f32 0.0, %v570
    %v572 = vpop.f32.mrf.mxu0
    %573 = vmatprep.mubr.f32.mxu0 0.0
    %574 = vmatmul.mubr.f32.gmra.mxu0 %v113
    %v575 = vpop.f32.mrf.mxu0
    %v576 = vadd.f32 0.0, %v575
    %v577 = vpop.f32.mrf.mxu0
    %578 = vmatprep.mubr.f32.mxu0 0.0
    %579 = vmatmul.mubr.f32.gmra.mxu0 %v116
    %v580 = vpop.f32.mrf.mxu0
    %v581 = vadd.f32 0.0, %v580
    %v582 = vpop.f32.mrf.mxu0
    %583 = vmatprep.mubr.f32.mxu0 0.0
    %584 = vmatmul.mubr.f32.gmra.mxu0 %v119
    %v585 = vpop.f32.mrf.mxu0
    %v586 = vadd.f32 0.0, %v585
    %v587 = vpop.f32.mrf.mxu0
    %588 = vmatprep.mubr.f32.mxu0 0.0
    %589 = vmatmul.mubr.f32.gmra.mxu0 %v122
    %v590 = vpop.f32.mrf.mxu0
    %v591 = vadd.f32 0.0, %v590
    %v592 = vpop.f32.mrf.mxu0
    %593 = vmatprep.mubr.f32.mxu0 0.0
    %594 = vmatmul.mubr.f32.gmra.mxu0 %v125
    %v595 = vpop.f32.mrf.mxu0
    %v596 = vadd.f32 0.0, %v595
    %v597 = vpop.f32.mrf.mxu0
    %598 = vmatprep.mubr.f32.mxu0 0.0
    %599 = vmatmul.mubr.f32.gmra.mxu0 %v128
    %v600 = vpop.f32.mrf.mxu0
    %v601 = vadd.f32 0.0, %v600
    %v602 = vpop.f32.mrf.mxu0
    %603 = vmatprep.mubr.f32.mxu0 0.0
    %604 = vmatmul.mubr.f32.gmra.mxu0 %v131
    %v605 = vpop.f32.mrf.mxu0
    %v606 = vadd.f32 0.0, %v605
    %v607 = vpop.f32.mrf.mxu0
    %608 = vmatprep.mubr.f32.mxu0 0.0
    %609 = vmatmul.mubr.f32.gmra.mxu0 %v134
    %v610 = vpop.f32.mrf.mxu0
    %v611 = vadd.f32 0.0, %v610
    %v612 = vpop.f32.mrf.mxu0
    %613 = vmatprep.mubr.f32.mxu0 0.0
    %614 = vmatmul.mubr.f32.gmra.mxu0 %v137
    %v615 = vpop.f32.mrf.mxu0
    %v616 = vadd.f32 0.0, %v615
    %v617 = vpop.f32.mrf.mxu0
    %618 = vmatprep.mubr.f32.mxu0 0.0
    %619 = vmatmul.mubr.f32.gmra.mxu0 %v140
    %v620 = vpop.f32.mrf.mxu0
    %v621 = vadd.f32 0.0, %v620
    %v622 = vpop.f32.mrf.mxu0
    %623 = vmatprep.mubr.f32.mxu0 0.0
    %624 = vmatmul.mubr.f32.gmra.mxu0 %v143
    %v625 = vpop.f32.mrf.mxu0
    %v626 = vadd.f32 0.0, %v625
    %v627 = vpop.f32.mrf.mxu0
    %628 = vdwg.mxu0
    %vm661 = vcmask 1046528
    %v662 = vrot.slane %v471, 1
    %v663 = vrot.slane %v476, 1
    %v664 = vsel %vm661, %v662, %v663
    %v665 = vrot.slane %v481, 1
    %v666 = vrot.slane %v486, 1
    %v667 = vsel %vm661, %v665, %v666
    %v668 = vrot.slane %v491, 1
    %v669 = vrot.slane %v496, 1
    %v670 = vsel %vm661, %v668, %v669
    %v671 = vrot.slane %v501, 1
    %v672 = vrot.slane %v506, 1
    %v673 = vsel %vm661, %v671, %v672
    %v674 = vrot.slane %v511, 1
    %v675 = vrot.slane %v516, 1
    %v676 = vsel %vm661, %v674, %v675
    %v677 = vrot.slane %v521, 1
    %v678 = vrot.slane %v526, 1
    %v679 = vsel %vm661, %v677, %v678
    %v680 = vrot.slane %v531, 1
    %v681 = vrot.slane %v536, 1
    %v682 = vsel %vm661, %v680, %v681
    %v683 = vrot.slane %v541, 1
    %v684 = vrot.slane %v546, 1
    %v685 = vsel %vm661, %v683, %v684
    %v686 = vrot.slane %v551, 1
    %v687 = vrot.slane %v556, 1
    %v688 = vsel %vm661, %v686, %v687
    %v689 = vrot.slane %v561, 1
    %v690 = vrot.slane %v566, 1
    %v691 = vsel %vm661, %v689, %v690
    %v692 = vrot.slane %v571, 1
    %v693 = vrot.slane %v576, 1
    %v694 = vsel %vm661, %v692, %v693
    %v695 = vrot.slane %v581, 1
    %v696 = vrot.slane %v586, 1
    %v697 = vsel %vm661, %v695, %v696
    %v698 = vrot.slane %v591, 1
    %v699 = vrot.slane %v596, 1
    %v700 = vsel %vm661, %v698, %v699
    %v701 = vrot.slane %v601, 1
    %v702 = vrot.slane %v606, 1
    %v703 = vsel %vm661, %v701, %v702
    %v704 = vrot.slane %v611, 1
    %v705 = vrot.slane %v616, 1
    %v706 = vsel %vm661, %v704, %v705
    %v707 = vrot.slane %v621, 1
    %v708 = vrot.slane %v626, 1
    %v709 = vsel %vm661, %v707, %v708
    %v742 = vadd.f32 %v370, %v664
    %v743 = vadd.f32 %v371, %v663
    %v744 = vadd.f32 %v372, %v667
    %v745 = vadd.f32 %v373, %v666
    %v746 = vadd.f32 %v374, %v670
    %v747 = vadd.f32 %v375, %v669
    %v748 = vadd.f32 %v376, %v673
    %v749 = vadd.f32 %v377, %v672
    %v750 = vadd.f32 %v378, %v676
    %v751 = vadd.f32 %v379, %v675
    %v752 = vadd.f32 %v380, %v679
    %v753 = vadd.f32 %v381, %v678
    %v754 = vadd.f32 %v382, %v682
    %v755 = vadd.f32 %v383, %v681
    %v756 = vadd.f32 %v384, %v685
    %v757 = vadd.f32 %v385, %v684
    %v758 = vadd.f32 %v386, %v688
    %v759 = vadd.f32 %v387, %v687
    %v760 = vadd.f32 %v388, %v691
    %v761 = vadd.f32 %v389, %v690
    %v762 = vadd.f32 %v390, %v694
    %v763 = vadd.f32 %v391, %v693
    %v764 = vadd.f32 %v392, %v697
    %v765 = vadd.f32 %v393, %v696
    %v766 = vadd.f32 %v394, %v700
    %v767 = vadd.f32 %v395, %v699
    %v768 = vadd.f32 %v396, %v703
    %v769 = vadd.f32 %v397, %v702
    %v770 = vadd.f32 %v398, %v706
    %v771 = vadd.f32 %v399, %v705
    %v772 = vadd.f32 %v400, %v709
    %v773 = vadd.f32 %v401, %v708
    %s774 = scalar_lea.vmem %s1, 16
    %v775 = vld [vmem:[%s774] sm:$0xff]
    %776 = vmatprep.subr.mxu0 0.0
    %777 = vmatpush1.msra.mxu0 0.0
    %778 = vmatprep.subr.mxu0 0.0
    %779 = vmatpush1.msra.mxu0 0.0
    %780 = vmatprep.subr.mxu0 0.0
    %781 = vmatpush1.msra.mxu0 0.0
    %782 = vmatprep.subr.mxu0 0.0
    %783 = vmatpush1.msra.mxu0 0.0
    %784 = vmatprep.subr.mxu0 0.0
    %785 = vmatpush1.msra.mxu0 0.0
    %786 = vmatprep.subr.mxu0 0.0
    %787 = vmatpush1.msra.mxu0 0.0
    %788 = vmatprep.subr.mxu0 0.0
    %789 = vmatpush1.msra.mxu0 0.0
    %790 = vmatprep.subr.mxu0 0.0
    %791 = vmatpush1.msra.mxu0 0.0
    %792 = vmatprep.subr.mxu0 0.0
    %793 = vmatpush1.msra.mxu0 0.0
    %794 = vmatprep.subr.mxu0 0.0
    %795 = vmatpush1.msra.mxu0 0.0
    %796 = vmatprep.subr.mxu0 0.0
    %797 = vmatpush1.msra.mxu0 0.0
    %798 = vmatprep.subr.mxu0 0.0
    %799 = vmatpush1.msra.mxu0 0.0
    %800 = vmatprep.subr.mxu0 0.0
    %801 = vmatpush1.msra.mxu0 0.0
    %802 = vmatprep.subr.mxu0 0.0
    %803 = vmatpush1.msra.mxu0 0.0
    %804 = vmatprep.subr.mxu0 0.0
    %805 = vmatpush1.msra.mxu0 0.0
    %806 = vmatprep.subr.mxu0 0.0
    %807 = vmatpush1.msra.mxu0 %v775
    %808 = vmatprep.subr.mxu0 0.0
    %809 = vmatpush2.msra.mxu0 0.0
    %810 = vmatprep.subr.mxu0 0.0
    %811 = vmatpush2.msra.mxu0 0.0
    %812 = vmatprep.subr.mxu0 0.0
    %813 = vmatpush2.msra.mxu0 0.0
    %814 = vmatprep.subr.mxu0 0.0
    %815 = vmatpush2.msra.mxu0 0.0
    %816 = vmatprep.subr.mxu0 0.0
    %817 = vmatpush2.msra.mxu0 0.0
    %818 = vmatprep.subr.mxu0 0.0
    %819 = vmatpush2.msra.mxu0 0.0
    %820 = vmatprep.subr.mxu0 0.0
    %821 = vmatpush2.msra.mxu0 0.0
    %822 = vmatprep.subr.mxu0 0.0
    %823 = vmatpush2.msra.mxu0 0.0
    %824 = vmatprep.subr.mxu0 0.0
    %825 = vmatpush2.msra.mxu0 0.0
    %826 = vmatprep.subr.mxu0 0.0
    %827 = vmatpush2.msra.mxu0 0.0
    %828 = vmatprep.subr.mxu0 0.0
    %829 = vmatpush2.msra.mxu0 0.0
    %830 = vmatprep.subr.mxu0 0.0
    %831 = vmatpush2.msra.mxu0 0.0
    %832 = vmatprep.subr.mxu0 0.0
    %833 = vmatpush2.msra.mxu0 0.0
    %834 = vmatprep.subr.mxu0 0.0
    %835 = vmatpush2.msra.mxu0 0.0
    %836 = vmatprep.subr.mxu0 0.0
    %837 = vmatpush2.msra.mxu0 0.0
    %838 = vmatprep.subr.mxu0 0.0
    %839 = vmatpush2.msra.mxu0 0.0
    %840 = vmatprep.mubr.f32.mxu0 0.0
    %841 = vmatmul.mubr.f32.gmra.mxu0 %v50
    %v842 = vpop.f32.mrf.mxu0
    %v843 = vadd.f32 0.0, %v842
    %v844 = vpop.f32.mrf.mxu0
    %845 = vmatprep.mubr.f32.mxu0 0.0
    %846 = vmatmul.mubr.f32.gmra.mxu0 %v53
    %v847 = vpop.f32.mrf.mxu0
    %v848 = vadd.f32 0.0, %v847
    %v849 = vpop.f32.mrf.mxu0
    %850 = vmatprep.mubr.f32.mxu0 0.0
    %851 = vmatmul.mubr.f32.gmra.mxu0 %v56
    %v852 = vpop.f32.mrf.mxu0
    %v853 = vadd.f32 0.0, %v852
    %v854 = vpop.f32.mrf.mxu0
    %855 = vmatprep.mubr.f32.mxu0 0.0
    %856 = vmatmul.mubr.f32.gmra.mxu0 %v59
    %v857 = vpop.f32.mrf.mxu0
    %v858 = vadd.f32 0.0, %v857
    %v859 = vpop.f32.mrf.mxu0
    %860 = vmatprep.mubr.f32.mxu0 0.0
    %861 = vmatmul.mubr.f32.gmra.mxu0 %v62
    %v862 = vpop.f32.mrf.mxu0
    %v863 = vadd.f32 0.0, %v862
    %v864 = vpop.f32.mrf.mxu0
    %865 = vmatprep.mubr.f32.mxu0 0.0
    %866 = vmatmul.mubr.f32.gmra.mxu0 %v65
    %v867 = vpop.f32.mrf.mxu0
    %v868 = vadd.f32 0.0, %v867
    %v869 = vpop.f32.mrf.mxu0
    %870 = vmatprep.mubr.f32.mxu0 0.0
    %871 = vmatmul.mubr.f32.gmra.mxu0 %v68
    %v872 = vpop.f32.mrf.mxu0
    %v873 = vadd.f32 0.0, %v872
    %v874 = vpop.f32.mrf.mxu0
    %875 = vmatprep.mubr.f32.mxu0 0.0
    %876 = vmatmul.mubr.f32.gmra.mxu0 %v71
    %v877 = vpop.f32.mrf.mxu0
    %v878 = vadd.f32 0.0, %v877
    %v879 = vpop.f32.mrf.mxu0
    %880 = vmatprep.mubr.f32.mxu0 0.0
    %881 = vmatmul.mubr.f32.gmra.mxu0 %v74
    %v882 = vpop.f32.mrf.mxu0
    %v883 = vadd.f32 0.0, %v882
    %v884 = vpop.f32.mrf.mxu0
    %885 = vmatprep.mubr.f32.mxu0 0.0
    %886 = vmatmul.mubr.f32.gmra.mxu0 %v77
    %v887 = vpop.f32.mrf.mxu0
    %v888 = vadd.f32 0.0, %v887
    %v889 = vpop.f32.mrf.mxu0
    %890 = vmatprep.mubr.f32.mxu0 0.0
    %891 = vmatmul.mubr.f32.gmra.mxu0 %v80
    %v892 = vpop.f32.mrf.mxu0
    %v893 = vadd.f32 0.0, %v892
    %v894 = vpop.f32.mrf.mxu0
    %895 = vmatprep.mubr.f32.mxu0 0.0
    %896 = vmatmul.mubr.f32.gmra.mxu0 %v83
    %v897 = vpop.f32.mrf.mxu0
    %v898 = vadd.f32 0.0, %v897
    %v899 = vpop.f32.mrf.mxu0
    %900 = vmatprep.mubr.f32.mxu0 0.0
    %901 = vmatmul.mubr.f32.gmra.mxu0 %v86
    %v902 = vpop.f32.mrf.mxu0
    %v903 = vadd.f32 0.0, %v902
    %v904 = vpop.f32.mrf.mxu0
    %905 = vmatprep.mubr.f32.mxu0 0.0
    %906 = vmatmul.mubr.f32.gmra.mxu0 %v89
    %v907 = vpop.f32.mrf.mxu0
    %v908 = vadd.f32 0.0, %v907
    %v909 = vpop.f32.mrf.mxu0
    %910 = vmatprep.mubr.f32.mxu0 0.0
    %911 = vmatmul.mubr.f32.gmra.mxu0 %v92
    %v912 = vpop.f32.mrf.mxu0
    %v913 = vadd.f32 0.0, %v912
    %v914 = vpop.f32.mrf.mxu0
    %915 = vmatprep.mubr.f32.mxu0 0.0
    %916 = vmatmul.mubr.f32.gmra.mxu0 %v95
    %v917 = vpop.f32.mrf.mxu0
    %v918 = vadd.f32 0.0, %v917
    %v919 = vpop.f32.mrf.mxu0
    %920 = vmatprep.mubr.f32.mxu0 0.0
    %921 = vmatmul.mubr.f32.gmra.mxu0 %v98
    %v922 = vpop.f32.mrf.mxu0
    %v923 = vadd.f32 0.0, %v922
    %v924 = vpop.f32.mrf.mxu0
    %925 = vmatprep.mubr.f32.mxu0 0.0
    %926 = vmatmul.mubr.f32.gmra.mxu0 %v101
    %v927 = vpop.f32.mrf.mxu0
    %v928 = vadd.f32 0.0, %v927
    %v929 = vpop.f32.mrf.mxu0
    %930 = vmatprep.mubr.f32.mxu0 0.0
    %931 = vmatmul.mubr.f32.gmra.mxu0 %v104
    %v932 = vpop.f32.mrf.mxu0
    %v933 = vadd.f32 0.0, %v932
    %v934 = vpop.f32.mrf.mxu0
    %935 = vmatprep.mubr.f32.mxu0 0.0
    %936 = vmatmul.mubr.f32.gmra.mxu0 %v107
    %v937 = vpop.f32.mrf.mxu0
    %v938 = vadd.f32 0.0, %v937
    %v939 = vpop.f32.mrf.mxu0
    %940 = vmatprep.mubr.f32.mxu0 0.0
    %941 = vmatmul.mubr.f32.gmra.mxu0 %v110
    %v942 = vpop.f32.mrf.mxu0
    %v943 = vadd.f32 0.0, %v942
    %v944 = vpop.f32.mrf.mxu0
    %945 = vmatprep.mubr.f32.mxu0 0.0
    %946 = vmatmul.mubr.f32.gmra.mxu0 %v113
    %v947 = vpop.f32.mrf.mxu0
    %v948 = vadd.f32 0.0, %v947
    %v949 = vpop.f32.mrf.mxu0
    %950 = vmatprep.mubr.f32.mxu0 0.0
    %951 = vmatmul.mubr.f32.gmra.mxu0 %v116
    %v952 = vpop.f32.mrf.mxu0
    %v953 = vadd.f32 0.0, %v952
    %v954 = vpop.f32.mrf.mxu0
    %955 = vmatprep.mubr.f32.mxu0 0.0
    %956 = vmatmul.mubr.f32.gmra.mxu0 %v119
    %v957 = vpop.f32.mrf.mxu0
    %v958 = vadd.f32 0.0, %v957
    %v959 = vpop.f32.mrf.mxu0
    %960 = vmatprep.mubr.f32.mxu0 0.0
    %961 = vmatmul.mubr.f32.gmra.mxu0 %v122
    %v962 = vpop.f32.mrf.mxu0
    %v963 = vadd.f32 0.0, %v962
    %v964 = vpop.f32.mrf.mxu0
    %965 = vmatprep.mubr.f32.mxu0 0.0
    %966 = vmatmul.mubr.f32.gmra.mxu0 %v125
    %v967 = vpop.f32.mrf.mxu0
    %v968 = vadd.f32 0.0, %v967
    %v969 = vpop.f32.mrf.mxu0
    %970 = vmatprep.mubr.f32.mxu0 0.0
    %971 = vmatmul.mubr.f32.gmra.mxu0 %v128
    %v972 = vpop.f32.mrf.mxu0
    %v973 = vadd.f32 0.0, %v972
    %v974 = vpop.f32.mrf.mxu0
    %975 = vmatprep.mubr.f32.mxu0 0.0
    %976 = vmatmul.mubr.f32.gmra.mxu0 %v131
    %v977 = vpop.f32.mrf.mxu0
    %v978 = vadd.f32 0.0, %v977
    %v979 = vpop.f32.mrf.mxu0
    %980 = vmatprep.mubr.f32.mxu0 0.0
    %981 = vmatmul.mubr.f32.gmra.mxu0 %v134
    %v982 = vpop.f32.mrf.mxu0
    %v983 = vadd.f32 0.0, %v982
    %v984 = vpop.f32.mrf.mxu0
    %985 = vmatprep.mubr.f32.mxu0 0.0
    %986 = vmatmul.mubr.f32.gmra.mxu0 %v137
    %v987 = vpop.f32.mrf.mxu0
    %v988 = vadd.f32 0.0, %v987
    %v989 = vpop.f32.mrf.mxu0
    %990 = vmatprep.mubr.f32.mxu0 0.0
    %991 = vmatmul.mubr.f32.gmra.mxu0 %v140
    %v992 = vpop.f32.mrf.mxu0
    %v993 = vadd.f32 0.0, %v992
    %v994 = vpop.f32.mrf.mxu0
    %995 = vmatprep.mubr.f32.mxu0 0.0
    %996 = vmatmul.mubr.f32.gmra.mxu0 %v143
    %v997 = vpop.f32.mrf.mxu0
    %v998 = vadd.f32 0.0, %v997
    %v999 = vpop.f32.mrf.mxu0
    %1000 = vdwg.mxu0
    %vm1033 = vcmask 1045504
    %v1034 = vrot.slane %v843, 2
    %v1035 = vrot.slane %v848, 2
    %v1036 = vsel %vm1033, %v1034, %v1035
    %v1037 = vrot.slane %v853, 2
    %v1038 = vrot.slane %v858, 2
    %v1039 = vsel %vm1033, %v1037, %v1038
    %v1040 = vrot.slane %v863, 2
    %v1041 = vrot.slane %v868, 2
    %v1042 = vsel %vm1033, %v1040, %v1041
    %v1043 = vrot.slane %v873, 2
    %v1044 = vrot.slane %v878, 2
    %v1045 = vsel %vm1033, %v1043, %v1044
    %v1046 = vrot.slane %v883, 2
    %v1047 = vrot.slane %v888, 2
    %v1048 = vsel %vm1033, %v1046, %v1047
    %v1049 = vrot.slane %v893, 2
    %v1050 = vrot.slane %v898, 2
    %v1051 = vsel %vm1033, %v1049, %v1050
    %v1052 = vrot.slane %v903, 2
    %v1053 = vrot.slane %v908, 2
    %v1054 = vsel %vm1033, %v1052, %v1053
    %v1055 = vrot.slane %v913, 2
    %v1056 = vrot.slane %v918, 2
    %v1057 = vsel %vm1033, %v1055, %v1056
    %v1058 = vrot.slane %v923, 2
    %v1059 = vrot.slane %v928, 2
    %v1060 = vsel %vm1033, %v1058, %v1059
    %v1061 = vrot.slane %v933, 2
    %v1062 = vrot.slane %v938, 2
    %v1063 = vsel %vm1033, %v1061, %v1062
    %v1064 = vrot.slane %v943, 2
    %v1065 = vrot.slane %v948, 2
    %v1066 = vsel %vm1033, %v1064, %v1065
    %v1067 = vrot.slane %v953, 2
    %v1068 = vrot.slane %v958, 2
    %v1069 = vsel %vm1033, %v1067, %v1068
    %v1070 = vrot.slane %v963, 2
    %v1071 = vrot.slane %v968, 2
    %v1072 = vsel %vm1033, %v1070, %v1071
    %v1073 = vrot.slane %v973, 2
    %v1074 = vrot.slane %v978, 2
    %v1075 = vsel %vm1033, %v1073, %v1074
    %v1076 = vrot.slane %v983, 2
    %v1077 = vrot.slane %v988, 2
    %v1078 = vsel %vm1033, %v1076, %v1077
    %v1079 = vrot.slane %v993, 2
    %v1080 = vrot.slane %v998, 2
    %v1081 = vsel %vm1033, %v1079, %v1080
    %v1114 = vadd.f32 %v742, %v1036
    %v1115 = vadd.f32 %v743, %v1035
    %v1116 = vadd.f32 %v744, %v1039
    %v1117 = vadd.f32 %v745, %v1038
    %v1118 = vadd.f32 %v746, %v1042
    %v1119 = vadd.f32 %v747, %v1041
    %v1120 = vadd.f32 %v748, %v1045
    %v1121 = vadd.f32 %v749, %v1044
    %v1122 = vadd.f32 %v750, %v1048
    %v1123 = vadd.f32 %v751, %v1047
    %v1124 = vadd.f32 %v752, %v1051
    %v1125 = vadd.f32 %v753, %v1050
    %v1126 = vadd.f32 %v754, %v1054
    %v1127 = vadd.f32 %v755, %v1053
    %v1128 = vadd.f32 %v756, %v1057
    %v1129 = vadd.f32 %v757, %v1056
    %v1130 = vadd.f32 %v758, %v1060
    %v1131 = vadd.f32 %v759, %v1059
    %v1132 = vadd.f32 %v760, %v1063
    %v1133 = vadd.f32 %v761, %v1062
    %v1134 = vadd.f32 %v762, %v1066
    %v1135 = vadd.f32 %v763, %v1065
    %v1136 = vadd.f32 %v764, %v1069
    %v1137 = vadd.f32 %v765, %v1068
    %v1138 = vadd.f32 %v766, %v1072
    %v1139 = vadd.f32 %v767, %v1071
    %v1140 = vadd.f32 %v768, %v1075
    %v1141 = vadd.f32 %v769, %v1074
    %v1142 = vadd.f32 %v770, %v1078
    %v1143 = vadd.f32 %v771, %v1077
    %v1144 = vadd.f32 %v772, %v1081
    %v1145 = vadd.f32 %v773, %v1080
    %v1146 = vld [vmem:[%s2] sm:$0x1]
    %v1148 = vlaneseq
    %v1149 = vshrl.u32 %v1148, 7
    %v1150 = vsub.s32 0, %v1149
    %v1151 = vrot.slane %v1146, %v1150
    %v1153 = vadd.f32 %v1114, %v1151
    %v1154 = vadd.f32 %v1115, %v1151
    %v1155 = vadd.f32 %v1116, %v1151
    %v1156 = vadd.f32 %v1117, %v1151
    %v1157 = vadd.f32 %v1118, %v1151
    %v1158 = vadd.f32 %v1119, %v1151
    %v1159 = vadd.f32 %v1120, %v1151
    %v1160 = vadd.f32 %v1121, %v1151
    %v1161 = vadd.f32 %v1122, %v1151
    %v1162 = vadd.f32 %v1123, %v1151
    %v1163 = vadd.f32 %v1124, %v1151
    %v1164 = vadd.f32 %v1125, %v1151
    %v1165 = vadd.f32 %v1126, %v1151
    %v1166 = vadd.f32 %v1127, %v1151
    %v1167 = vadd.f32 %v1128, %v1151
    %v1168 = vadd.f32 %v1129, %v1151
    %v1169 = vadd.f32 %v1130, %v1151
    %v1170 = vadd.f32 %v1131, %v1151
    %v1171 = vadd.f32 %v1132, %v1151
    %v1172 = vadd.f32 %v1133, %v1151
    %v1173 = vadd.f32 %v1134, %v1151
    %v1174 = vadd.f32 %v1135, %v1151
    %v1175 = vadd.f32 %v1136, %v1151
    %v1176 = vadd.f32 %v1137, %v1151
    %v1177 = vadd.f32 %v1138, %v1151
    %v1178 = vadd.f32 %v1139, %v1151
    %v1179 = vadd.f32 %v1140, %v1151
    %v1180 = vadd.f32 %v1141, %v1151
    %v1181 = vadd.f32 %v1142, %v1151
    %v1182 = vadd.f32 %v1143, %v1151
    %v1183 = vadd.f32 %v1144, %v1151
    %v1184 = vadd.f32 %v1145, %v1151
    %v1185 = vmax.f32 %v1153, 0.0
    %v1186 = vmax.f32 %v1154, 0.0
    %v1187 = vmax.f32 %v1155, 0.0
    %v1188 = vmax.f32 %v1156, 0.0
    %v1189 = vmax.f32 %v1157, 0.0
    %v1190 = vmax.f32 %v1158, 0.0
    %v1191 = vmax.f32 %v1159, 0.0
    %v1192 = vmax.f32 %v1160, 0.0
    %v1193 = vmax.f32 %v1161, 0.0
    %v1194 = vmax.f32 %v1162, 0.0
    %v1195 = vmax.f32 %v1163, 0.0
    %v1196 = vmax.f32 %v1164, 0.0
    %v1197 = vmax.f32 %v1165, 0.0
    %v1198 = vmax.f32 %v1166, 0.0
    %v1199 = vmax.f32 %v1167, 0.0
    %v1200 = vmax.f32 %v1168, 0.0
    %v1201 = vmax.f32 %v1169, 0.0
    %v1202 = vmax.f32 %v1170, 0.0
    %v1203 = vmax.f32 %v1171, 0.0
    %v1204 = vmax.f32 %v1172, 0.0
    %v1205 = vmax.f32 %v1173, 0.0
    %v1206 = vmax.f32 %v1174, 0.0
    %v1207 = vmax.f32 %v1175, 0.0
    %v1208 = vmax.f32 %v1176, 0.0
    %v1209 = vmax.f32 %v1177, 0.0
    %v1210 = vmax.f32 %v1178, 0.0
    %v1211 = vmax.f32 %v1179, 0.0
    %v1212 = vmax.f32 %v1180, 0.0
    %v1213 = vmax.f32 %v1181, 0.0
    %v1214 = vmax.f32 %v1182, 0.0
    %v1215 = vmax.f32 %v1183, 0.0
    %v1216 = vmax.f32 %v1184, 0.0
    %v1217 = vsel %vm1033, %v1186, -inf
    %v1218 = vmax.f32 %v1185, %v1217
    %v1219 = vrot.slane %v1218, 4
    %v1220 = vmax.f32 %v1218, %v1219
    %v1221 = vrot.slane %v1220, 2
    %v1222 = vmax.f32 %v1220, %v1221
    %v1223 = vrot.slane %v1222, 1
    %v1224 = vmax.f32 %v1222, %v1223
    %v1225 = vsel %vm1033, %v1188, -inf
    %v1226 = vmax.f32 %v1187, %v1225
    %v1227 = vrot.slane %v1226, 4
    %v1228 = vmax.f32 %v1226, %v1227
    %v1229 = vrot.slane %v1228, 2
    %v1230 = vmax.f32 %v1228, %v1229
    %v1231 = vrot.slane %v1230, 1
    %v1232 = vmax.f32 %v1230, %v1231
    %v1233 = vsel %vm1033, %v1190, -inf
    %v1234 = vmax.f32 %v1189, %v1233
    %v1235 = vrot.slane %v1234, 4
    %v1236 = vmax.f32 %v1234, %v1235
    %v1237 = vrot.slane %v1236, 2
    %v1238 = vmax.f32 %v1236, %v1237
    %v1239 = vrot.slane %v1238, 1
    %v1240 = vmax.f32 %v1238, %v1239
    %v1241 = vsel %vm1033, %v1192, -inf
    %v1242 = vmax.f32 %v1191, %v1241
    %v1243 = vrot.slane %v1242, 4
    %v1244 = vmax.f32 %v1242, %v1243
    %v1245 = vrot.slane %v1244, 2
    %v1246 = vmax.f32 %v1244, %v1245
    %v1247 = vrot.slane %v1246, 1
    %v1248 = vmax.f32 %v1246, %v1247
    %v1249 = vsel %vm1033, %v1194, -inf
    %v1250 = vmax.f32 %v1193, %v1249
    %v1251 = vrot.slane %v1250, 4
    %v1252 = vmax.f32 %v1250, %v1251
    %v1253 = vrot.slane %v1252, 2
    %v1254 = vmax.f32 %v1252, %v1253
    %v1255 = vrot.slane %v1254, 1
    %v1256 = vmax.f32 %v1254, %v1255
    %v1257 = vsel %vm1033, %v1196, -inf
    %v1258 = vmax.f32 %v1195, %v1257
    %v1259 = vrot.slane %v1258, 4
    %v1260 = vmax.f32 %v1258, %v1259
    %v1261 = vrot.slane %v1260, 2
    %v1262 = vmax.f32 %v1260, %v1261
    %v1263 = vrot.slane %v1262, 1
    %v1264 = vmax.f32 %v1262, %v1263
    %v1265 = vsel %vm1033, %v1198, -inf
    %v1266 = vmax.f32 %v1197, %v1265
    %v1267 = vrot.slane %v1266, 4
    %v1268 = vmax.f32 %v1266, %v1267
    %v1269 = vrot.slane %v1268, 2
    %v1270 = vmax.f32 %v1268, %v1269
    %v1271 = vrot.slane %v1270, 1
    %v1272 = vmax.f32 %v1270, %v1271
    %v1273 = vsel %vm1033, %v1200, -inf
    %v1274 = vmax.f32 %v1199, %v1273
    %v1275 = vrot.slane %v1274, 4
    %v1276 = vmax.f32 %v1274, %v1275
    %v1277 = vrot.slane %v1276, 2
    %v1278 = vmax.f32 %v1276, %v1277
    %v1279 = vrot.slane %v1278, 1
    %v1280 = vmax.f32 %v1278, %v1279
    %v1281 = vsel %vm1033, %v1202, -inf
    %v1282 = vmax.f32 %v1201, %v1281
    %v1283 = vrot.slane %v1282, 4
    %v1284 = vmax.f32 %v1282, %v1283
    %v1285 = vrot.slane %v1284, 2
    %v1286 = vmax.f32 %v1284, %v1285
    %v1287 = vrot.slane %v1286, 1
    %v1288 = vmax.f32 %v1286, %v1287
    %v1289 = vsel %vm1033, %v1204, -inf
    %v1290 = vmax.f32 %v1203, %v1289
    %v1291 = vrot.slane %v1290, 4
    %v1292 = vmax.f32 %v1290, %v1291
    %v1293 = vrot.slane %v1292, 2
    %v1294 = vmax.f32 %v1292, %v1293
    %v1295 = vrot.slane %v1294, 1
    %v1296 = vmax.f32 %v1294, %v1295
    %v1297 = vsel %vm1033, %v1206, -inf
    %v1298 = vmax.f32 %v1205, %v1297
    %v1299 = vrot.slane %v1298, 4
    %v1300 = vmax.f32 %v1298, %v1299
    %v1301 = vrot.slane %v1300, 2
    %v1302 = vmax.f32 %v1300, %v1301
    %v1303 = vrot.slane %v1302, 1
    %v1304 = vmax.f32 %v1302, %v1303
    %v1305 = vsel %vm1033, %v1208, -inf
    %v1306 = vmax.f32 %v1207, %v1305
    %v1307 = vrot.slane %v1306, 4
    %v1308 = vmax.f32 %v1306, %v1307
    %v1309 = vrot.slane %v1308, 2
    %v1310 = vmax.f32 %v1308, %v1309
    %v1311 = vrot.slane %v1310, 1
    %v1312 = vmax.f32 %v1310, %v1311
    %v1313 = vsel %vm1033, %v1210, -inf
    %v1314 = vmax.f32 %v1209, %v1313
    %v1315 = vrot.slane %v1314, 4
    %v1316 = vmax.f32 %v1314, %v1315
    %v1317 = vrot.slane %v1316, 2
    %v1318 = vmax.f32 %v1316, %v1317
    %v1319 = vrot.slane %v1318, 1
    %v1320 = vmax.f32 %v1318, %v1319
    %v1321 = vsel %vm1033, %v1212, -inf
    %v1322 = vmax.f32 %v1211, %v1321
    %v1323 = vrot.slane %v1322, 4
    %v1324 = vmax.f32 %v1322, %v1323
    %v1325 = vrot.slane %v1324, 2
    %v1326 = vmax.f32 %v1324, %v1325
    %v1327 = vrot.slane %v1326, 1
    %v1328 = vmax.f32 %v1326, %v1327
    %v1329 = vsel %vm1033, %v1214, -inf
    %v1330 = vmax.f32 %v1213, %v1329
    %v1331 = vrot.slane %v1330, 4
    %v1332 = vmax.f32 %v1330, %v1331
    %v1333 = vrot.slane %v1332, 2
    %v1334 = vmax.f32 %v1332, %v1333
    %v1335 = vrot.slane %v1334, 1
    %v1336 = vmax.f32 %v1334, %v1335
    %v1337 = vsel %vm1033, %v1216, -inf
    %v1338 = vmax.f32 %v1215, %v1337
    %v1339 = vrot.slane %v1338, 4
    %v1340 = vmax.f32 %v1338, %v1339
    %v1341 = vrot.slane %v1340, 2
    %v1342 = vmax.f32 %v1340, %v1341
    %v1343 = vrot.slane %v1342, 1
    %v1344 = vmax.f32 %v1342, %v1343
    %vm1361 = vcmask 1041409
    %v1362 = vsel %vm1361, %v1232, %v1224
    %vm1363 = vcmask 1042434
    %v1364 = vsel %vm1363, %v1240, %v1362
    %vm1365 = vcmask 1043459
    %v1366 = vsel %vm1365, %v1248, %v1364
    %vm1367 = vcmask 1044484
    %v1368 = vsel %vm1367, %v1256, %v1366
    %vm1369 = vcmask 1045509
    %v1370 = vsel %vm1369, %v1264, %v1368
    %vm1371 = vcmask 1046534
    %v1372 = vsel %vm1371, %v1272, %v1370
    %vm1373 = vcmask 1047559
    %v1374 = vsel %vm1373, %v1280, %v1372
    %v1375 = vsel %vm1361, %v1296, %v1288
    %v1376 = vsel %vm1363, %v1304, %v1375
    %v1377 = vsel %vm1365, %v1312, %v1376
    %v1378 = vsel %vm1367, %v1320, %v1377
    %v1379 = vsel %vm1369, %v1328, %v1378
    %v1380 = vsel %vm1371, %v1336, %v1379
    %v1381 = vsel %vm1373, %v1344, %v1380
    %1384 = vst [vmem:[#allocation2] sm:$0xff] %v1374
    %1385 = vst [vmem:[#allocation2 + $0x8] sm:$0xff] %v1381
    // Predicated region
    $region14: #{tpu_custom_call.1} parent=1 // pred_check
      _
    $region15: #{tpu_custom_call.1} parent=1 // pred_check_branch
      %1387 = sbr.rel (0) target = $region17
    $region16: #{tpu_custom_call.1} parent=1 // pred_region
      %s1389 = ssub.s32 256, 256
      %1390 = vsyncadd [#allocation3], %s1389
      %s1391 = sshll.u32 [#allocation2], 4
      %s1392 = int_to_ptr.vmem [resolvable:$true] %s1391
      %1397 = dma.vmem_to_hbm [thread:$0]  %s1392, 256, %s3, [#allocation3], 128, 128, 8
    $region17: #{tpu_custom_call.1} parent=1 // pred_fallthru
      _
    // Predicated region
    $region18: #{tpu_custom_call.1} parent=1 // pred_check
      _
    $region19: #{tpu_custom_call.1} parent=1 // pred_check_branch
      %1399 = sbr.rel (0) target = $region21
    $region20: #{tpu_custom_call.1} parent=1 // pred_region
      %1400 = dma.done [#allocation3], 256
    $region21: #{tpu_custom_call.1} parent=1 // pred_fallthru
      _
    %1401 = vsyncpa [#allocation3], 1

</llo_original>
